<compile_context>
chip_gen: v7x
topology: tpu7x:2x2x1
jax: 0.10.0
libtpu: 0.0.40
codegen_flags: <defaults>
</compile_context>

<pallas_src>
import functools

import jax
import jax.numpy as jnp
from jax.experimental import pallas as pl
from jax.experimental.pallas import tpu as pltpu


def _round_up(n, m):
    return ((n + m - 1) // m) * m


def _prior_kernel(k_eff, has_gt,
                  x_ref, g_ref, w1_ref, b1_ref, w2_ref, b2_ref,
                  w3_ref, b3_ref, *rest):
    """Fused Prior forward for one batch tile.

    k_eff:  static int, number of valid code logits (code_dim if is_high,
            code_dim - 1 otherwise -> Categorical(logits=logits[:, :-1])).
    has_gt: static bool, whether a ground-truth code tile is supplied.
    """
    if has_gt:
        code_gt_ref, out_ref = rest
    else:
        (out_ref,) = rest

    f32 = jnp.float32
    bf16 = jnp.bfloat16

    # ---- MLP: Linear -> ReLU -> Linear -> ReLU -> Linear (bf16 MXU, f32 acc)
    x = x_ref[...].astype(bf16)
    h1 = jnp.dot(x, w1_ref[...], preferred_element_type=f32) + b1_ref[...]
    h1 = jnp.maximum(h1, 0.0).astype(bf16)
    h2 = jnp.dot(h1, w2_ref[...], preferred_element_type=f32) + b2_ref[...]
    h2 = jnp.maximum(h2, 0.0).astype(bf16)
    logits = jnp.dot(h2, w3_ref[...], preferred_element_type=f32) + b3_ref[...]

    tb, k = logits.shape

    # ---- Categorical over the first k_eff logits (all f32) -----------------
    lane = jax.lax.broadcasted_iota(jnp.int32, (tb, k), 1)
    valid = lane < k_eff
    neg_inf = jnp.float32(-1e30)
    masked = jnp.where(valid, logits, neg_inf)

    # numerically stable log-softmax restricted to valid lanes
    m = jnp.max(masked, axis=-1, keepdims=True)
    z = jnp.where(valid, jnp.exp(masked - m), 0.0)
    lse = m + jnp.log(jnp.sum(z, axis=-1, keepdims=True))
    logsm = masked - lse   # invalid lanes stay hugely negative; never gathered

    # ---- Gumbel-max sampling with host-provided Gumbel(0,1) noise ----------
    # TODO(synk): pltpu.prng_seed/prng_random_bits would remove this (TB, K)
    # noise stream entirely, but the primitive has no CPU/interpret lowering
    # in the sandbox harness, so noise is generated host-side instead.
    perturbed = jnp.where(valid, masked + g_ref[...].astype(f32), neg_inf)
    pmax = jnp.max(perturbed, axis=-1, keepdims=True)
    # first index attaining the max (matches argmax tie-breaking); stays 2-D
    code = jnp.min(jnp.where(perturbed == pmax, lane, k),
                   axis=-1, keepdims=True)                       # (tb, 1) i32

    # log_prob(code): one-hot gather along the lane axis
    logp_code = jnp.sum(jnp.where(lane == code, logsm, 0.0),
                        axis=-1, keepdims=True)

    if has_gt:
        gt = code_gt_ref[...]                                    # (tb, 1) i32
        # precondition: 0 <= code_gt < k_eff (same as torch Categorical)
        logp = jnp.sum(jnp.where(lane == gt, logsm, 0.0),
                       axis=-1, keepdims=True)

    # ---- Narrow packed output: 8 lanes/row (16x less HBM than 128 lanes) ---
    # lane 0: code (exact in f32 for code_dim < 2^24), lane 1: logp_code,
    # lane 2: logp.
    out_lane = jax.lax.broadcasted_iota(jnp.int32, (tb, 8), 1)
    packed = jnp.where(out_lane == 0, code.astype(f32),
                       jnp.where(out_lane == 1, logp_code, 0.0))
    if has_gt:
        packed = jnp.where(out_lane == 2, logp, packed)
    out_ref[...] = packed


def prior_forward(params, x, seed, code_gt=None, *, is_high=False, tile_b=1024):
    """Runs the Prior forward pass.

    params: dict with w1 (D,H), b1 (1,H), w2 (H,H), b2 (1,H), w3 (H,K), b3 (1,K)
    x:      (B, D) float array (f32 or bf16)
    seed:   int seeding the host-side Gumbel noise for Categorical sampling
    code_gt:(B,) int32 or None (values must lie in [0, k_eff))
    Returns (code, logp, logp_code) mirroring the PyTorch module.
    """
    B, D = x.shape
    H = params["w2"].shape[0]
    K = params["w3"].shape[1]
    k_eff = K if is_high else K - 1
    has_gt = code_gt is not None

    # Batch tiling: big tiles amortize per-grid-step overhead; per-step VMEM
    # footprint is tiny (x + noise + out ~ a few hundred KiB at these dims).
    # Keep >= 2 grid steps for large batches so v7x's two TensorCores both
    # get work along the "parallel" axis.
    TB = min(_round_up(tile_b, 8), _round_up(B, 8))
    nb = -(-B // TB)
    if nb == 1 and B > 512:
        TB = _round_up((B + 1) // 2, 8)
        nb = -(-B // TB)
    B_pad = nb * TB

    # Accept bf16 inputs as-is (halves the x DMA); fall back to f32 otherwise.
    if x.dtype != jnp.bfloat16:
        x = x.astype(jnp.float32)
    if B_pad != B:
        x = jnp.pad(x, ((0, B_pad - B), (0, 0)))

    # Host-side Gumbel(0,1) noise for Gumbel-max sampling (tiny: K*4 B/row).
    gumbel = jax.random.gumbel(jax.random.PRNGKey(seed), (B_pad, K),
                               jnp.float32)

    if has_gt:
        gt2d = code_gt.astype(jnp.int32).reshape(B, 1)
        if B_pad != B:
            gt2d = jnp.pad(gt2d, ((0, B_pad - B), (0, 0)))

    # bf16 weights hit the MXU's native path; biases stay f32 (f32 accumulate).
    w1 = params["w1"].astype(jnp.bfloat16)
    w2 = params["w2"].astype(jnp.bfloat16)
    w3 = params["w3"].astype(jnp.bfloat16)
    b1 = params["b1"].astype(jnp.float32)
    b2 = params["b2"].astype(jnp.float32)
    b3 = params["b3"].astype(jnp.float32)

    tile_map = lambda i: (i, 0)     # batch-tiled operands
    fixed_map = lambda i: (0, 0)    # VMEM-resident weights / biases
    # NOTE: weights are grid-invariant; at production H consider single-
    # buffering them (pipeline_mode) to reclaim VMEM for a larger TB.

    in_specs = [
        pl.BlockSpec((TB, D), tile_map),
        pl.BlockSpec((TB, K), tile_map),
        pl.BlockSpec((D, H), fixed_map),
        pl.BlockSpec((1, H), fixed_map),
        pl.BlockSpec((H, H), fixed_map),
        pl.BlockSpec((1, H), fixed_map),
        pl.BlockSpec((H, K), fixed_map),
        pl.BlockSpec((1, K), fixed_map),
    ]
    args = [x, gumbel, w1, b1, w2, b2, w3, b3]
    if has_gt:
        in_specs.append(pl.BlockSpec((TB, 1), tile_map))
        args.append(gt2d)

    kernel = functools.partial(_prior_kernel, k_eff, has_gt)

    packed = pl.pallas_call(
        kernel,
        out_shape=jax.ShapeDtypeStruct((B_pad, 8), jnp.float32),
        grid_spec=pltpu.PrefetchScalarGridSpec(
            num_scalar_prefetch=0,
            grid=(nb,),
            in_specs=in_specs,
            out_specs=pl.BlockSpec((TB, 8), tile_map),
        ),
        compiler_params=pltpu.CompilerParams(
            dimension_semantics=("parallel",)),
    )(*args)

    packed = packed[:B]
    code = packed[:, 0].astype(jnp.int32)
    logp_code = packed[:, 1]
    logp = packed[:, 2] if has_gt else None
    return code, logp, logp_code


def init_prior_params(key, input_dim, hidden_dim, code_dim):
    """Deterministic synthetic parameter init (Glorot-ish scaling)."""
    ks = jax.random.split(key, 3)

    def lin(k, din, dout):
        scale = 1.0 / jnp.sqrt(jnp.float32(din))
        w = jax.random.uniform(k, (din, dout), jnp.float32, -scale, scale)
        b = jnp.zeros((1, dout), jnp.float32)
        return w, b

    w1, b1 = lin(ks[0], input_dim, hidden_dim)
    w2, b2 = lin(ks[1], hidden_dim, hidden_dim)
    w3, b3 = lin(ks[2], hidden_dim, code_dim)
    return dict(w1=w1, b1=b1, w2=w2, b2=b2, w3=w3, b3=b3)


if __name__ == "__main__":
    B, INPUT_DIM, HIDDEN_DIM, CODE_DIM = 8, 32, 32, 8
    IS_HIGH = False  # matches Prior(..., is_high=False): drops last logit col

    root = jax.random.PRNGKey(0)
    k_params, k_x, k_gt = jax.random.split(root, 3)

    params = init_prior_params(k_params, INPUT_DIM, HIDDEN_DIM, CODE_DIM)
    x = jax.random.normal(k_x, (B, INPUT_DIM), jnp.float32)
    k_eff = CODE_DIM if IS_HIGH else CODE_DIM - 1
    code_gt = jax.random.randint(k_gt, (B,), 0, k_eff, jnp.int32)

    # with ground-truth codes
    code, logp, logp_code = prior_forward(params, x, seed=1234,
                                          code_gt=code_gt, is_high=IS_HIGH)
    jax.block_until_ready((code, logp, logp_code))

    assert code.shape == (B,) and logp.shape == (B,) and logp_code.shape == (B,)
    assert int(code.max()) < k_eff and int(code.min()) >= 0
    assert bool(jnp.all(logp_code <= 0.0)) and bool(jnp.all(logp <= 0.0))

    # without ground-truth codes (static has_gt=False path)
    code2, logp2, logp_code2 = prior_forward(params, x, seed=7, is_high=IS_HIGH)
    jax.block_until_ready((code2, logp_code2))
    assert logp2 is None and code2.shape == (B,) and logp_code2.shape == (B,)
    assert int(code2.max()) < k_eff and int(code2.min()) >= 0

    print("KERNEL_OK")
</pallas_src>

<mosaic_0001>
module attributes {stable_mosaic.version = 11 : i64} {
  func.func @_prior_kernel(%arg0: i32, %arg1: memref<8x32xf32, #tpu.memory_space<vmem>>, %arg2: memref<8x8xf32, #tpu.memory_space<vmem>>, %arg3: memref<32x32xbf16, #tpu.memory_space<vmem>>, %arg4: memref<1x32xf32, #tpu.memory_space<vmem>>, %arg5: memref<32x32xbf16, #tpu.memory_space<vmem>>, %arg6: memref<1x32xf32, #tpu.memory_space<vmem>>, %arg7: memref<32x8xbf16, #tpu.memory_space<vmem>>, %arg8: memref<1x8xf32, #tpu.memory_space<vmem>>, %arg9: memref<8x1xi32, #tpu.memory_space<vmem>>, %arg10: memref<8x8xf32, #tpu.memory_space<vmem>>) attributes {dimension_semantics = [#tpu.dimension_semantics<parallel>], iteration_bounds = array<i64: 1>, scalar_prefetch = 0 : i64, scratch_operands = 0 : i64, tpu.core_type = #tpu.core_type<tc>, window_params = [{transform_indices = @transform_0, window_bounds = array<i64: 8, 32>}, {transform_indices = @transform_1, window_bounds = array<i64: 8, 8>}, {pipeline_mode = #tpu.pipeline_mode<synchronous>, transform_indices = @transform_2, window_bounds = array<i64: 32, 32>}, {pipeline_mode = #tpu.pipeline_mode<synchronous>, transform_indices = @transform_3, window_bounds = array<i64: 1, 32>}, {pipeline_mode = #tpu.pipeline_mode<synchronous>, transform_indices = @transform_4, window_bounds = array<i64: 32, 32>}, {pipeline_mode = #tpu.pipeline_mode<synchronous>, transform_indices = @transform_5, window_bounds = array<i64: 1, 32>}, {pipeline_mode = #tpu.pipeline_mode<synchronous>, transform_indices = @transform_6, window_bounds = array<i64: 32, 8>}, {pipeline_mode = #tpu.pipeline_mode<synchronous>, transform_indices = @transform_7, window_bounds = array<i64: 1, 8>}, {transform_indices = @transform_8, window_bounds = array<i64: 8, 1>}, {transform_indices = @transform_9, window_bounds = array<i64: 8, 8>}]} {
    %c0 = arith.constant 0 : index
    %c0_0 = arith.constant 0 : index
    %0 = vector.load %arg1[%c0, %c0_0] : memref<8x32xf32, #tpu.memory_space<vmem>>, vector<8x32xf32>
    %1 = arith.truncf %0 : vector<8x32xf32> to vector<8x32xbf16>
    %c0_1 = arith.constant 0 : index
    %c0_2 = arith.constant 0 : index
    %2 = vector.load %arg3[%c0_1, %c0_2] : memref<32x32xbf16, #tpu.memory_space<vmem>>, vector<32x32xbf16>
    %cst = arith.constant dense<0.000000e+00> : vector<8x32xf32>
    %3 = tpu.matmul %1, %2, %cst {dimension_numbers = #tpu.dot_dimension_numbers<[1], [0], [0], [1], [0, 0, 1, 1], [], []>} : vector<8x32xbf16>, vector<32x32xbf16>, vector<8x32xf32> -> vector<8x32xf32>
    %c0_3 = arith.constant 0 : index
    %c0_4 = arith.constant 0 : index
    %4 = vector.load %arg4[%c0_3, %c0_4] : memref<1x32xf32, #tpu.memory_space<vmem>>, vector<1x32xf32>
    %5 = vector.broadcast %4 : vector<1x32xf32> to vector<8x32xf32>
    %6 = arith.addf %3, %5 : vector<8x32xf32>
    %cst_5 = arith.constant 0.000000e+00 : f32
    %7 = vector.broadcast %cst_5 : f32 to vector<8x32xf32>
    %8 = arith.maximumf %6, %7 : vector<8x32xf32>
    %9 = arith.truncf %8 : vector<8x32xf32> to vector<8x32xbf16>
    %c0_6 = arith.constant 0 : index
    %c0_7 = arith.constant 0 : index
    %10 = vector.load %arg5[%c0_6, %c0_7] : memref<32x32xbf16, #tpu.memory_space<vmem>>, vector<32x32xbf16>
    %cst_8 = arith.constant dense<0.000000e+00> : vector<8x32xf32>
    %11 = tpu.matmul %9, %10, %cst_8 {dimension_numbers = #tpu.dot_dimension_numbers<[1], [0], [0], [1], [0, 0, 1, 1], [], []>} : vector<8x32xbf16>, vector<32x32xbf16>, vector<8x32xf32> -> vector<8x32xf32>
    %c0_9 = arith.constant 0 : index
    %c0_10 = arith.constant 0 : index
    %12 = vector.load %arg6[%c0_9, %c0_10] : memref<1x32xf32, #tpu.memory_space<vmem>>, vector<1x32xf32>
    %13 = vector.broadcast %12 : vector<1x32xf32> to vector<8x32xf32>
    %14 = arith.addf %11, %13 : vector<8x32xf32>
    %cst_11 = arith.constant 0.000000e+00 : f32
    %15 = vector.broadcast %cst_11 : f32 to vector<8x32xf32>
    %16 = arith.maximumf %14, %15 : vector<8x32xf32>
    %17 = arith.truncf %16 : vector<8x32xf32> to vector<8x32xbf16>
    %c0_12 = arith.constant 0 : index
    %c0_13 = arith.constant 0 : index
    %18 = vector.load %arg7[%c0_12, %c0_13] : memref<32x8xbf16, #tpu.memory_space<vmem>>, vector<32x8xbf16>
    %cst_14 = arith.constant dense<0.000000e+00> : vector<8x8xf32>
    %19 = tpu.matmul %17, %18, %cst_14 {dimension_numbers = #tpu.dot_dimension_numbers<[1], [0], [0], [1], [0, 0, 1, 1], [], []>} : vector<8x32xbf16>, vector<32x8xbf16>, vector<8x8xf32> -> vector<8x8xf32>
    %c0_15 = arith.constant 0 : index
    %c0_16 = arith.constant 0 : index
    %20 = vector.load %arg8[%c0_15, %c0_16] : memref<1x8xf32, #tpu.memory_space<vmem>>, vector<1x8xf32>
    %21 = vector.broadcast %20 : vector<1x8xf32> to vector<8x8xf32>
    %22 = arith.addf %19, %21 : vector<8x8xf32>
    %23 = tpu.iota {dimensions = array<i32: 1>} : vector<8x8xi32>
    %c7_i32 = arith.constant 7 : i32
    %24 = vector.broadcast %c7_i32 : i32 to vector<8x8xi32>
    %25 = arith.cmpi slt, %23, %24 : vector<8x8xi32>
    %cst_17 = arith.constant -1.000000e+30 : f32
    %26 = vector.broadcast %cst_17 : f32 to vector<8x8xf32>
    %27 = arith.select %25, %22, %26 : vector<8x8xi1>, vector<8x8xf32>
    %cst_18 = arith.constant dense<0xFF800000> : vector<8xf32>
    %28 = vector.multi_reduction <maximumf>, %27, %cst_18 [1] : vector<8x8xf32> to vector<8xf32>
    %29 = vector.shape_cast %28 : vector<8xf32> to vector<8x1xf32>
    %30 = vector.broadcast %29 : vector<8x1xf32> to vector<8x8xf32>
    %31 = arith.subf %27, %30 : vector<8x8xf32>
    %32 = math.exp %31 : vector<8x8xf32>
    %cst_19 = arith.constant 0.000000e+00 : f32
    %33 = vector.broadcast %cst_19 : f32 to vector<8x8xf32>
    %34 = arith.select %25, %32, %33 : vector<8x8xi1>, vector<8x8xf32>
    %cst_20 = arith.constant dense<0.000000e+00> : vector<8xf32>
    %35 = vector.multi_reduction <add>, %34, %cst_20 [1] : vector<8x8xf32> to vector<8xf32>
    %36 = vector.shape_cast %35 : vector<8xf32> to vector<8x1xf32>
    %37 = math.log %36 : vector<8x1xf32>
    %38 = arith.addf %29, %37 : vector<8x1xf32>
    %39 = vector.broadcast %38 : vector<8x1xf32> to vector<8x8xf32>
    %40 = arith.subf %27, %39 : vector<8x8xf32>
    %c0_21 = arith.constant 0 : index
    %c0_22 = arith.constant 0 : index
    %41 = vector.load %arg2[%c0_21, %c0_22] : memref<8x8xf32, #tpu.memory_space<vmem>>, vector<8x8xf32>
    %42 = arith.addf %27, %41 : vector<8x8xf32>
    %cst_23 = arith.constant -1.000000e+30 : f32
    %43 = vector.broadcast %cst_23 : f32 to vector<8x8xf32>
    %44 = arith.select %25, %42, %43 : vector<8x8xi1>, vector<8x8xf32>
    %cst_24 = arith.constant dense<0xFF800000> : vector<8xf32>
    %45 = vector.multi_reduction <maximumf>, %44, %cst_24 [1] : vector<8x8xf32> to vector<8xf32>
    %46 = vector.shape_cast %45 : vector<8xf32> to vector<8x1xf32>
    %47 = vector.broadcast %46 : vector<8x1xf32> to vector<8x8xf32>
    %48 = arith.cmpf oeq, %44, %47 : vector<8x8xf32>
    %c8_i32 = arith.constant 8 : i32
    %49 = vector.broadcast %c8_i32 : i32 to vector<8x8xi32>
    %50 = arith.select %48, %23, %49 : vector<8x8xi1>, vector<8x8xi32>
    %cst_25 = arith.constant dense<2147483647> : vector<8xi32>
    %51 = vector.multi_reduction <minsi>, %50, %cst_25 [1] : vector<8x8xi32> to vector<8xi32>
    %52 = vector.shape_cast %51 : vector<8xi32> to vector<8x1xi32>
    %53 = vector.broadcast %52 : vector<8x1xi32> to vector<8x8xi32>
    %54 = arith.cmpi eq, %23, %53 : vector<8x8xi32>
    %cst_26 = arith.constant 0.000000e+00 : f32
    %55 = vector.broadcast %cst_26 : f32 to vector<8x8xf32>
    %56 = arith.select %54, %40, %55 : vector<8x8xi1>, vector<8x8xf32>
    %cst_27 = arith.constant dense<0.000000e+00> : vector<8xf32>
    %57 = vector.multi_reduction <add>, %56, %cst_27 [1] : vector<8x8xf32> to vector<8xf32>
    %58 = vector.shape_cast %57 : vector<8xf32> to vector<8x1xf32>
    %c0_28 = arith.constant 0 : index
    %c0_29 = arith.constant 0 : index
    %59 = vector.load %arg9[%c0_28, %c0_29] : memref<8x1xi32, #tpu.memory_space<vmem>>, vector<8x1xi32>
    %60 = vector.broadcast %59 : vector<8x1xi32> to vector<8x8xi32>
    %61 = arith.cmpi eq, %23, %60 : vector<8x8xi32>
    %cst_30 = arith.constant 0.000000e+00 : f32
    %62 = vector.broadcast %cst_30 : f32 to vector<8x8xf32>
    %63 = arith.select %61, %40, %62 : vector<8x8xi1>, vector<8x8xf32>
    %cst_31 = arith.constant dense<0.000000e+00> : vector<8xf32>
    %64 = vector.multi_reduction <add>, %63, %cst_31 [1] : vector<8x8xf32> to vector<8xf32>
    %65 = vector.shape_cast %64 : vector<8xf32> to vector<8x1xf32>
    %66 = tpu.iota {dimensions = array<i32: 1>} : vector<8x8xi32>
    %c0_i32 = arith.constant 0 : i32
    %67 = vector.broadcast %c0_i32 : i32 to vector<8x8xi32>
    %68 = arith.cmpi eq, %66, %67 : vector<8x8xi32>
    %69 = arith.sitofp %52 : vector<8x1xi32> to vector<8x1xf32>
    %c1_i32 = arith.constant 1 : i32
    %70 = vector.broadcast %c1_i32 : i32 to vector<8x8xi32>
    %71 = arith.cmpi eq, %66, %70 : vector<8x8xi32>
    %cst_32 = arith.constant 0.000000e+00 : f32
    %72 = vector.shape_cast %58 : vector<8x1xf32> to vector<8x1xf32>
    %73 = vector.broadcast %72 : vector<8x1xf32> to vector<8x8xf32>
    %74 = vector.broadcast %cst_32 : f32 to vector<8x8xf32>
    %75 = arith.select %71, %73, %74 : vector<8x8xi1>, vector<8x8xf32>
    %76 = vector.shape_cast %69 : vector<8x1xf32> to vector<8x1xf32>
    %77 = vector.broadcast %76 : vector<8x1xf32> to vector<8x8xf32>
    %78 = arith.select %68, %77, %75 : vector<8x8xi1>, vector<8x8xf32>
    %c2_i32 = arith.constant 2 : i32
    %79 = vector.broadcast %c2_i32 : i32 to vector<8x8xi32>
    %80 = arith.cmpi eq, %66, %79 : vector<8x8xi32>
    %81 = vector.shape_cast %65 : vector<8x1xf32> to vector<8x1xf32>
    %82 = vector.broadcast %81 : vector<8x1xf32> to vector<8x8xf32>
    %83 = arith.select %80, %82, %78 : vector<8x8xi1>, vector<8x8xf32>
    %c0_33 = arith.constant 0 : index
    %c0_34 = arith.constant 0 : index
    %84 = vector.load %arg10[%c0_33, %c0_34] : memref<8x8xf32, #tpu.memory_space<vmem>>, vector<8x8xf32>
    tpu.vector_store %arg10[%c0_33, %c0_34], %83 {strides = array<i32>} : memref<8x8xf32, #tpu.memory_space<vmem>>, vector<8x8xf32>,
    return
  }
  func.func @transform_0(%arg0: i32) -> (i32, i32) {
    %c0_i32 = arith.constant 0 : i32
    %c0_i32_0 = arith.constant 0 : i32
    return %arg0, %c0_i32 : i32, i32
  }
  func.func @transform_1(%arg0: i32) -> (i32, i32) {
    %c0_i32 = arith.constant 0 : i32
    %c0_i32_0 = arith.constant 0 : i32
    return %arg0, %c0_i32 : i32, i32
  }
  func.func @transform_2(%arg0: i32) -> (i32, i32) {
    %c0_i32 = arith.constant 0 : i32
    %c0_i32_0 = arith.constant 0 : i32
    %c0_i32_1 = arith.constant 0 : i32
    return %c0_i32, %c0_i32_0 : i32, i32
  }
  func.func @transform_3(%arg0: i32) -> (i32, i32) {
    %c0_i32 = arith.constant 0 : i32
    %c0_i32_0 = arith.constant 0 : i32
    %c0_i32_1 = arith.constant 0 : i32
    return %c0_i32, %c0_i32_0 : i32, i32
  }
  func.func @transform_4(%arg0: i32) -> (i32, i32) {
    %c0_i32 = arith.constant 0 : i32
    %c0_i32_0 = arith.constant 0 : i32
    %c0_i32_1 = arith.constant 0 : i32
    return %c0_i32, %c0_i32_0 : i32, i32
  }
  func.func @transform_5(%arg0: i32) -> (i32, i32) {
    %c0_i32 = arith.constant 0 : i32
    %c0_i32_0 = arith.constant 0 : i32
    %c0_i32_1 = arith.constant 0 : i32
    return %c0_i32, %c0_i32_0 : i32, i32
  }
  func.func @transform_6(%arg0: i32) -> (i32, i32) {
    %c0_i32 = arith.constant 0 : i32
    %c0_i32_0 = arith.constant 0 : i32
    %c0_i32_1 = arith.constant 0 : i32
    return %c0_i32, %c0_i32_0 : i32, i32
  }
  func.func @transform_7(%arg0: i32) -> (i32, i32) {
    %c0_i32 = arith.constant 0 : i32
    %c0_i32_0 = arith.constant 0 : i32
    %c0_i32_1 = arith.constant 0 : i32
    return %c0_i32, %c0_i32_0 : i32, i32
  }
  func.func @transform_8(%arg0: i32) -> (i32, i32) {
    %c0_i32 = arith.constant 0 : i32
    %c0_i32_0 = arith.constant 0 : i32
    return %arg0, %c0_i32 : i32, i32
  }
  func.func @transform_9(%arg0: i32) -> (i32, i32) {
    %c0_i32 = arith.constant 0 : i32
    %c0_i32_0 = arith.constant 0 : i32
    return %arg0, %c0_i32 : i32, i32
  }
}

</mosaic_0001>

<llo_original>
// kernel: tpu_custom_call.1
$region0: #{tpu_custom_call.1}
  #allocation0 [shape = 'u32[]', space=smem, size = 0x4, offset = 0x4, fixed_abs, tag = 'smem constant byte address 0x4 - core index']
  #allocation1 [shape = 'u32[144,128]{1,0:T(1,128)}', space=vmem, size = 0x12000, scoped, tag = 'internal scratch']
  %s0 = inlined_call_operand.hbm [shape: f32[8,32], index: 0, kind: input, shape index: {}]
  %s1 = inlined_call_operand.hbm [shape: f32[8,8], index: 1, kind: input, shape index: {}]
  %s2 = inlined_call_operand.vmem [shape: bf16[32,32], index: 2, kind: input, shape index: {}]
  %s3 = inlined_call_operand.vmem [shape: f32[1,32], index: 3, kind: input, shape index: {}]
  %s4 = inlined_call_operand.vmem [shape: bf16[32,32], index: 4, kind: input, shape index: {}]
  %s5 = inlined_call_operand.vmem [shape: f32[1,32], index: 5, kind: input, shape index: {}]
  %s6 = inlined_call_operand.vmem [shape: bf16[32,8], index: 6, kind: input, shape index: {}]
  %s7 = inlined_call_operand.vmem [shape: f32[1,8], index: 7, kind: input, shape index: {}]
  %s8 = inlined_call_operand.vmem [shape: s32[8,1], index: 8, kind: input, shape index: {}]
  %s9 = inlined_call_operand.hbm [shape: f32[8,8], index: 9, kind: output, shape index: {}]
  %s10 = sld [smem:[#allocation0]]
  $region54: #{tpu_custom_call.1} parent=0
    _
  %s12 = ssub.s32 1, %s10
  %s13 = scalar_select 0, %s12, %s10
  $region1: #{tpu_custom_call.1} parent=0
    #allocation2 [shape = 'u8[4096]{0}', space=vmem, size = 0x1000, scoped, tag = 'input window, operand 0, single buffered']
    #allocation3 [shape = 's32[1]{0}', space=sflag, size = 0x4, scoped, tag = 'scoped memory for tpu_custom_call.1']
    #allocation4 [shape = 's32[1]{0}', space=sflag, size = 0x4, scoped, tag = 'scoped memory for tpu_custom_call.1']
    #allocation5 [shape = 'u8[4096]{0}', space=vmem, size = 0x1000, scoped, tag = 'input window, operand 1, single buffered']
    #allocation6 [shape = 's32[1]{0}', space=sflag, size = 0x4, scoped, tag = 'scoped memory for tpu_custom_call.1']
    #allocation7 [shape = 'u8[4096]{0}', space=vmem, size = 0x1000, scoped, tag = 'output window, operand 0, single buffered']
    %14 = vsyncpa [#allocation3], 0
    %15 = vsyncpa [#allocation6], 0
    %16 = vsyncpa [#allocation4], 0
    // Predicated region
    $region2: #{tpu_custom_call.1} parent=1 // pred_check
      _
    $region3: #{tpu_custom_call.1} parent=1 // pred_check_branch
      %18 = sbr.rel (0) target = $region5
    $region4: #{tpu_custom_call.1} parent=1 // pred_region
      %s20 = ssub.s32 128, 128
      %21 = vsyncadd [#allocation3], %s20
      %s23 = sshll.u32 [#allocation2], 4
      %s24 = int_to_ptr.vmem [resolvable:$true] %s23
      %26 = dma.hbm_to_vmem [thread:$0]  %s0, 128, %s24, [#allocation3]
    $region5: #{tpu_custom_call.1} parent=1 // pred_fallthru
      _
    // Predicated region
    $region6: #{tpu_custom_call.1} parent=1 // pred_check
      _
    $region7: #{tpu_custom_call.1} parent=1 // pred_check_branch
      %28 = sbr.rel (0) target = $region9
    $region8: #{tpu_custom_call.1} parent=1 // pred_region
      %s30 = ssub.s32 128, 128
      %31 = vsyncadd [#allocation6], %s30
      %s33 = sshll.u32 [#allocation5], 4
      %s34 = int_to_ptr.vmem [resolvable:$true] %s33
      %36 = dma.hbm_to_vmem [thread:$0]  %s1, 128, %s34, [#allocation6]
    $region9: #{tpu_custom_call.1} parent=1 // pred_fallthru
      _
    // Predicated region
    $region10: #{tpu_custom_call.1} parent=1 // pred_check
      _
    $region11: #{tpu_custom_call.1} parent=1 // pred_check_branch
      %38 = sbr.rel (0) target = $region13
    $region12: #{tpu_custom_call.1} parent=1 // pred_region
      _
    $region13: #{tpu_custom_call.1} parent=1 // pred_fallthru
      _
    // Predicated region
    $region14: #{tpu_custom_call.1} parent=1 // pred_check
      _
    $region15: #{tpu_custom_call.1} parent=1 // pred_check_branch
      %40 = sbr.rel (0) target = $region17
    $region16: #{tpu_custom_call.1} parent=1 // pred_region
      _
    $region17: #{tpu_custom_call.1} parent=1 // pred_fallthru
      _
    // Predicated region
    $region18: #{tpu_custom_call.1} parent=1 // pred_check
      _
    $region19: #{tpu_custom_call.1} parent=1 // pred_check_branch
      %42 = sbr.rel (0) target = $region21
    $region20: #{tpu_custom_call.1} parent=1 // pred_region
      _
    $region21: #{tpu_custom_call.1} parent=1 // pred_fallthru
      _
    // Predicated region
    $region22: #{tpu_custom_call.1} parent=1 // pred_check
      _
    $region23: #{tpu_custom_call.1} parent=1 // pred_check_branch
      %44 = sbr.rel (0) target = $region25
    $region24: #{tpu_custom_call.1} parent=1 // pred_region
      _
    $region25: #{tpu_custom_call.1} parent=1 // pred_fallthru
      _
    // Predicated region
    $region26: #{tpu_custom_call.1} parent=1 // pred_check
      _
    $region27: #{tpu_custom_call.1} parent=1 // pred_check_branch
      %46 = sbr.rel (0) target = $region29
    $region28: #{tpu_custom_call.1} parent=1 // pred_region
      _
    $region29: #{tpu_custom_call.1} parent=1 // pred_fallthru
      _
    // Predicated region
    $region30: #{tpu_custom_call.1} parent=1 // pred_check
      _
    $region31: #{tpu_custom_call.1} parent=1 // pred_check_branch
      %48 = sbr.rel (0) target = $region33
    $region32: #{tpu_custom_call.1} parent=1 // pred_region
      _
    $region33: #{tpu_custom_call.1} parent=1 // pred_fallthru
      _
    // Predicated region
    $region34: #{tpu_custom_call.1} parent=1 // pred_check
      _
    $region35: #{tpu_custom_call.1} parent=1 // pred_check_branch
      %50 = sbr.rel (0) target = $region37
    $region36: #{tpu_custom_call.1} parent=1 // pred_region
      _
    $region37: #{tpu_custom_call.1} parent=1 // pred_fallthru
      _
    // Predicated region
    $region38: #{tpu_custom_call.1} parent=1 // pred_check
      _
    $region39: #{tpu_custom_call.1} parent=1 // pred_check_branch
      %52 = sbr.rel (0) target = $region41
    $region40: #{tpu_custom_call.1} parent=1 // pred_region
      %53 = dma.done [#allocation3], 128
    $region41: #{tpu_custom_call.1} parent=1 // pred_fallthru
      _
    // Predicated region
    $region42: #{tpu_custom_call.1} parent=1 // pred_check
      _
    $region43: #{tpu_custom_call.1} parent=1 // pred_check_branch
      %55 = sbr.rel (0) target = $region45
    $region44: #{tpu_custom_call.1} parent=1 // pred_region
      %56 = dma.done [#allocation6], 128
    $region45: #{tpu_custom_call.1} parent=1 // pred_fallthru
      _
    %v58 = vld [vmem:[#allocation2] sm:$0xff]
    %v59 = vpack.c.bf16 %v58, %v58
    %v60 = vld [vmem:[%s2] sm:$0xf]
    %v61 = vld [vmem:[%s2 + $0x4] sm:$0xf]
    %v62 = vld [vmem:[%s2 + $0x8] sm:$0xf]
    %v63 = vld [vmem:[%s2 + $0xc] sm:$0xf]
    %v64 = vld [vmem:[%s3] sm:$0x1]
    %v66 = vlaneseq
    %v67 = vshrl.u32 %v66, 7
    %v68 = vsub.s32 0, %v67
    %v69 = vrot.slane %v64, %v68
    %v75 = vunpack.c.l.b16 %v60
    %v76 = vunpack.c.l.b16 %v61
    %v77 = vunpack.c.l.b16 %v62
    %v78 = vunpack.c.l.b16 %v63
    %v79 = vpack.c.b16 %v76, %v75
    %v80 = vpack.c.b16 %v78, %v77
    %vm83 = vcmask 261120
    %v85 = vsel %vm83, %v59, 0
    %87 = vmatprep.subr.bf16.mxu0 0
    %88 = vmatpush1.bf16.msra.mxu0 %v79
    %89 = vmatprep.subr.bf16.mxu0 0
    %90 = vmatpush1.bf16.msra.mxu0 %v80
    %91 = vmatprep.subr.bf16.mxu0 0
    %92 = vmatpush1.bf16.msra.mxu0 0
    %93 = vmatprep.subr.bf16.mxu0 0
    %94 = vmatpush1.bf16.msra.mxu0 0
    %95 = vmatprep.subr.bf16.mxu0 0
    %96 = vmatpush1.bf16.msra.mxu0 0
    %97 = vmatprep.subr.bf16.mxu0 0
    %98 = vmatpush1.bf16.msra.mxu0 0
    %99 = vmatprep.subr.bf16.mxu0 0
    %100 = vmatpush1.bf16.msra.mxu0 0
    %101 = vmatprep.subr.bf16.mxu0 0
    %102 = vmatpush1.bf16.msra.mxu0 0
    %103 = vmatprep.subr.bf16.mxu0 0
    %104 = vmatpush1.bf16.msra.mxu0 0
    %105 = vmatprep.subr.bf16.mxu0 0
    %106 = vmatpush1.bf16.msra.mxu0 0
    %107 = vmatprep.subr.bf16.mxu0 0
    %108 = vmatpush1.bf16.msra.mxu0 0
    %109 = vmatprep.subr.bf16.mxu0 0
    %110 = vmatpush1.bf16.msra.mxu0 0
    %111 = vmatprep.subr.bf16.mxu0 0
    %112 = vmatpush1.bf16.msra.mxu0 0
    %113 = vmatprep.subr.bf16.mxu0 0
    %114 = vmatpush1.bf16.msra.mxu0 0
    %115 = vmatprep.subr.bf16.mxu0 0
    %116 = vmatpush1.bf16.msra.mxu0 0
    %117 = vmatprep.subr.bf16.mxu0 0
    %118 = vmatpush1.bf16.msra.mxu0 0
    %119 = vmatprep.mubr.bf16.mxu0 0
    %120 = vmatmul.mubr.bf16.gmra.mrb[0].mxu0 %v85
    %v121 = vpop.f32.mrb[0].mxu0
    %v122 = vadd.f32 %v69, %v121
    %v123 = vpop.f32.mrb[0].mxu0
    %v124 = vpop.f32.mrb[0].mxu0
    %v125 = vpop.f32.mrb[0].mxu0
    %126 = vdwg.mxu0
    %v127 = vmax.f32 %v122, 0.0
    %v128 = vpack.c.bf16 %v127, %v127
    %v129 = vld [vmem:[%s4] sm:$0xf]
    %v130 = vld [vmem:[%s4 + $0x4] sm:$0xf]
    %v131 = vld [vmem:[%s4 + $0x8] sm:$0xf]
    %v132 = vld [vmem:[%s4 + $0xc] sm:$0xf]
    %v133 = vld [vmem:[%s5] sm:$0x1]
    %v135 = vlaneseq
    %v136 = vshrl.u32 %v135, 7
    %v137 = vsub.s32 0, %v136
    %v138 = vrot.slane %v133, %v137
    %v144 = vunpack.c.l.b16 %v129
    %v145 = vunpack.c.l.b16 %v130
    %v146 = vunpack.c.l.b16 %v131
    %v147 = vunpack.c.l.b16 %v132
    %v148 = vpack.c.b16 %v145, %v144
    %v149 = vpack.c.b16 %v147, %v146
    %v153 = vsel %vm83, %v128, 0
    %155 = vmatprep.subr.bf16.mxu0 0
    %156 = vmatpush1.bf16.msra.mxu0 %v148
    %157 = vmatprep.subr.bf16.mxu0 0
    %158 = vmatpush1.bf16.msra.mxu0 %v149
    %159 = vmatprep.subr.bf16.mxu0 0
    %160 = vmatpush1.bf16.msra.mxu0 0
    %161 = vmatprep.subr.bf16.mxu0 0
    %162 = vmatpush1.bf16.msra.mxu0 0
    %163 = vmatprep.subr.bf16.mxu0 0
    %164 = vmatpush1.bf16.msra.mxu0 0
    %165 = vmatprep.subr.bf16.mxu0 0
    %166 = vmatpush1.bf16.msra.mxu0 0
    %167 = vmatprep.subr.bf16.mxu0 0
    %168 = vmatpush1.bf16.msra.mxu0 0
    %169 = vmatprep.subr.bf16.mxu0 0
    %170 = vmatpush1.bf16.msra.mxu0 0
    %171 = vmatprep.subr.bf16.mxu0 0
    %172 = vmatpush1.bf16.msra.mxu0 0
    %173 = vmatprep.subr.bf16.mxu0 0
    %174 = vmatpush1.bf16.msra.mxu0 0
    %175 = vmatprep.subr.bf16.mxu0 0
    %176 = vmatpush1.bf16.msra.mxu0 0
    %177 = vmatprep.subr.bf16.mxu0 0
    %178 = vmatpush1.bf16.msra.mxu0 0
    %179 = vmatprep.subr.bf16.mxu0 0
    %180 = vmatpush1.bf16.msra.mxu0 0
    %181 = vmatprep.subr.bf16.mxu0 0
    %182 = vmatpush1.bf16.msra.mxu0 0
    %183 = vmatprep.subr.bf16.mxu0 0
    %184 = vmatpush1.bf16.msra.mxu0 0
    %185 = vmatprep.subr.bf16.mxu0 0
    %186 = vmatpush1.bf16.msra.mxu0 0
    %187 = vmatprep.mubr.bf16.mxu0 0
    %188 = vmatmul.mubr.bf16.gmra.mrb[0].mxu0 %v153
    %v189 = vpop.f32.mrb[0].mxu0
    %v190 = vadd.f32 %v138, %v189
    %v191 = vpop.f32.mrb[0].mxu0
    %v192 = vpop.f32.mrb[0].mxu0
    %v193 = vpop.f32.mrb[0].mxu0
    %194 = vdwg.mxu0
    %v195 = vmax.f32 %v190, 0.0
    %v196 = vpack.c.bf16 %v195, %v195
    %v197 = vld [vmem:[%s6] sm:$0xf]
    %v198 = vld [vmem:[%s6 + $0x4] sm:$0xf]
    %v199 = vld [vmem:[%s6 + $0x8] sm:$0xf]
    %v200 = vld [vmem:[%s6 + $0xc] sm:$0xf]
    %v201 = vld [vmem:[%s7] sm:$0x1]
    %v203 = vlaneseq
    %v204 = vshrl.u32 %v203, 7
    %v205 = vsub.s32 0, %v204
    %v206 = vrot.slane %v201, %v205
    %v212 = vunpack.c.l.b16 %v197
    %v213 = vunpack.c.l.b16 %v198
    %v214 = vunpack.c.l.b16 %v199
    %v215 = vunpack.c.l.b16 %v200
    %v216 = vpack.c.b16 %v213, %v212
    %v217 = vpack.c.b16 %v215, %v214
    %v221 = vsel %vm83, %v196, 0
    %223 = vmatprep.subr.bf16.mxu0 0
    %224 = vmatpush1.bf16.msra.mxu0 %v216
    %225 = vmatprep.subr.bf16.mxu0 0
    %226 = vmatpush1.bf16.msra.mxu0 %v217
    %227 = vmatprep.subr.bf16.mxu0 0
    %228 = vmatpush1.bf16.msra.mxu0 0
    %229 = vmatprep.subr.bf16.mxu0 0
    %230 = vmatpush1.bf16.msra.mxu0 0
    %231 = vmatprep.subr.bf16.mxu0 0
    %232 = vmatpush1.bf16.msra.mxu0 0
    %233 = vmatprep.subr.bf16.mxu0 0
    %234 = vmatpush1.bf16.msra.mxu0 0
    %235 = vmatprep.subr.bf16.mxu0 0
    %236 = vmatpush1.bf16.msra.mxu0 0
    %237 = vmatprep.subr.bf16.mxu0 0
    %238 = vmatpush1.bf16.msra.mxu0 0
    %239 = vmatprep.subr.bf16.mxu0 0
    %240 = vmatpush1.bf16.msra.mxu0 0
    %241 = vmatprep.subr.bf16.mxu0 0
    %242 = vmatpush1.bf16.msra.mxu0 0
    %243 = vmatprep.subr.bf16.mxu0 0
    %244 = vmatpush1.bf16.msra.mxu0 0
    %245 = vmatprep.subr.bf16.mxu0 0
    %246 = vmatpush1.bf16.msra.mxu0 0
    %247 = vmatprep.subr.bf16.mxu0 0
    %248 = vmatpush1.bf16.msra.mxu0 0
    %249 = vmatprep.subr.bf16.mxu0 0
    %250 = vmatpush1.bf16.msra.mxu0 0
    %251 = vmatprep.subr.bf16.mxu0 0
    %252 = vmatpush1.bf16.msra.mxu0 0
    %253 = vmatprep.subr.bf16.mxu0 0
    %254 = vmatpush1.bf16.msra.mxu0 0
    %255 = vmatprep.mubr.bf16.mxu0 0
    %256 = vmatmul.mubr.bf16.gmra.mrb[0].mxu0 %v221
    %v257 = vpop.f32.mrb[0].mxu0
    %v258 = vadd.f32 %v206, %v257
    %v259 = vpop.f32.mrb[0].mxu0
    %v260 = vpop.f32.mrb[0].mxu0
    %v261 = vpop.f32.mrb[0].mxu0
    %262 = vdwg.mxu0
    %v263 = vlaneseq
    %v264 = vand.u32 %v263, 127
    %vm265 = vcmp.lt.s32.totalorder %v264, 7
    %v266 = vsel %vm265, %v258, -1e+30
    %vm267 = vcmask 64512
    %v268 = vsel %vm267, %v266, -inf
    %269 = vmax.xlane.f32.xlu0 %v268
    %v270 = vpop.xlane.xlu0 %269
    %v271 = vsub.f32 %v266, %v270
    %v272 = vmul.f32 %v271, 1.442695
    %v273 = vpow.pop %v272
    %v274 = vsel %vm265, %v273, 0.0
    %v275 = vsel %vm267, %v274, 0.0
    %276 = vadd.xlane.f32.xlu0 %v275
    %v277 = vpop.xlane.xlu0 %276
    %v278 = vlog2.pop %v277
    %v279 = vmul.f32 %v278, 0.6931472
    %v280 = vadd.f32 %v270, %v279
    %v281 = vsub.f32 %v266, %v280
    %v282 = vld [vmem:[#allocation5] sm:$0xff]
    %v283 = vadd.f32 %v266, %v282
    %v284 = vsel %vm265, %v283, -1e+30
    %v285 = vsel %vm267, %v284, -inf
    %286 = vmax.xlane.f32.xlu0 %v285
    %v287 = vpop.xlane.xlu0 %286
    %vm288 = vcmp.eq.f32.partialorder %v284, %v287
    %v289 = vsel %vm288, %v264, 8
    %v290 = vsel %vm267, %v289, 2147483647
    %v291 = vand.u32 %v290, 65535
    %v292 = vshra.s32 %v290, 16
    %v293 = vcvt.s32.f32 %v291
    %v294 = vcvt.s32.f32 %v292
    %295 = vmin.xlane.f32.xlu0 %v294
    %v296 = vpop.xlane.xlu0 %295
    %vm297 = vcmp.eq.f32.partialorder %v294, %v296
    %v298 = vsel %vm297, %v293, inf
    %299 = vmin.xlane.f32.xlu0 %v298
    %v300 = vpop.xlane.xlu0 %299
    %v301 = vcvt.f32.s32 %v300
    %v302 = vcvt.f32.s32 %v296
    %v303 = vshll.u32 %v302, 16
    %v304 = vadd.s32 %v303, %v301
    %vm305 = vcmp.eq.s32.totalorder %v264, %v304
    %v306 = vsel %vm305, %v281, 0.0
    %v307 = vsel %vm267, %v306, 0.0
    %308 = vadd.xlane.f32.xlu0 %v307
    %v309 = vpop.xlane.xlu0 %308
    %v310 = vld [vmem:[%s8] sm:$0xff]
    %311 = vset.pattern.permute.xlu0 0
    %312 = vperm.xlu0 %311, %v310
    %v313 = vpop.permute.xlu0 %312
    %vm314 = vcmp.eq.s32.totalorder %v264, %v313
    %v315 = vsel %vm314, %v281, 0.0
    %v316 = vsel %vm267, %v315, 0.0
    %317 = vadd.xlane.f32.xlu0 %v316
    %v318 = vpop.xlane.xlu0 %317
    %vm319 = vcmp.eq.s32.totalorder %v264, 0
    %v320 = vcvt.s32.f32 %v304
    %vm321 = vcmp.eq.s32.totalorder %v264, 1
    %v322 = vsel %vm321, %v309, 0.0
    %v323 = vsel %vm319, %v320, %v322
    %vm324 = vcmp.eq.s32.totalorder %v264, 2
    %v325 = vsel %vm324, %v318, %v323
    %326 = vst.msk [vmem:[#allocation7] sm:$0xff] %vm267, %v325
    // Predicated region
    $region46: #{tpu_custom_call.1} parent=1 // pred_check
      _
    $region47: #{tpu_custom_call.1} parent=1 // pred_check_branch
      %328 = sbr.rel (0) target = $region49
    $region48: #{tpu_custom_call.1} parent=1 // pred_region
      %s330 = ssub.s32 128, 128
      %331 = vsyncadd [#allocation4], %s330
      %s333 = sshll.u32 [#allocation7], 4
      %s334 = int_to_ptr.vmem [resolvable:$true] %s333
      %336 = dma.vmem_to_hbm [thread:$0]  %s334, 128, %s9, [#allocation4]
    $region49: #{tpu_custom_call.1} parent=1 // pred_fallthru
      _
    // Predicated region
    $region50: #{tpu_custom_call.1} parent=1 // pred_check
      _
    $region51: #{tpu_custom_call.1} parent=1 // pred_check_branch
      %338 = sbr.rel (0) target = $region53
    $region52: #{tpu_custom_call.1} parent=1 // pred_region
      %339 = dma.done [#allocation4], 128
    $region53: #{tpu_custom_call.1} parent=1 // pred_fallthru
      _
    %340 = vsyncpa [#allocation3], 1
    %341 = vsyncpa [#allocation6], 1
    %342 = vsyncpa [#allocation4], 1

</llo_original>
